<compile_context>
chip_gen: v7x
topology: tpu7x:2x2x1
jax: 0.10.0
libtpu: 0.0.40
codegen_flags: <defaults>
</compile_context>

<pallas_src>
import functools
import math

import jax
import jax.numpy as jnp
from jax.experimental import pallas as pl
from jax.experimental.pallas import tpu as pltpu

_NEG_PAD = -1e30                      # padding value for logits (rows/cols)
_SUBLANE = {4: 8, 2: 16, 1: 32}       # sublane alignment per itemsize
_LANE = 128


def _round_up(v, m):
    return ((v + m - 1) // m) * m


def _pick_tiles(n, c, itemsize):
    """Pick (tile_n, tile_c): ~8 MiB per x buffer, ~24 MiB total VMEM for the
    double-buffered streams + scratch (fits every generation incl. v7x's
    64 MiB physical VMEM, given the explicit vmem limit set in the wrapper)."""
    sub = _SUBLANE.get(itemsize, 8)
    lane_c = max(c, _LANE)                        # lane dim pads to 128 in VMEM
    x_buf_budget = 8 << 20                        # per x buffer (x2 double-buffer)
    total_budget = 24 << 20                       # all VMEM buffers together
    # (tile_n, 1) blocks (tgt, w_t double-buffered + 3x scratch) lane-pad to 128:
    per_row_aux = (2 * 2 + 3) * _LANE * 4
    per_row_full_c = 2 * lane_c * itemsize + per_row_aux
    rows_full_c = min(total_budget // per_row_full_c,
                      x_buf_budget // (lane_c * itemsize))
    if rows_full_c >= 64:
        # Whole class dim resident -> big batch tiles (HBM-bound regime).
        tile_c = c
        tile_n = min(rows_full_c, _round_up(n, sub))
    else:
        # Vocab-scale C: stream over the class dim with an online LSE.
        tile_n = max(sub, min(256, _round_up(n, sub)))
        tile_c = (x_buf_budget // (tile_n * itemsize)) // _LANE * _LANE
        tile_c = max(_LANE, min(tile_c, _round_up(c, _LANE)))
    tile_n = max(sub, (tile_n // sub) * sub)
    return int(tile_n), int(tile_c)


def _dro_kernel(x_ref, tgt_ref, wt_ref, out_ref, m_run, s_run, xt_run, *,
                epsilon, n_rows, tile_n, tile_c, n_c_tiles):
    i = pl.program_id(0)        # batch tile  ("parallel")
    j = pl.program_id(1)        # class tile  ("arbitrary", streaming LSE)

    x = x_ref[...].astype(jnp.float32)                          # (tile_n, tile_c)
    tgt = tgt_ref[...]                                          # (tile_n, 1) int32

    col = jax.lax.broadcasted_iota(jnp.int32, x.shape, 1) + j * tile_c
    onehot = col == tgt
    xt_blk = jnp.sum(jnp.where(onehot, x, 0.0), axis=-1, keepdims=True)  # (tile_n,1)
    m_blk = jnp.max(x, axis=-1, keepdims=True)                           # (tile_n,1)

    def finalize(m, s, x_t):
        # lse(out) = m_adj + log( s*exp(m-m_adj) + exp(x_t-m_adj)*(e^{-2eps}-1) )
        factor = math.exp(-2.0 * epsilon) - 1.0                 # compile-time const
        x_tm = x_t - 2.0 * epsilon
        if epsilon >= 0.0:
            m_adj = m                                           # x_tm <= max(x)
            s_adj = s + jnp.exp(x_t - m) * factor
        else:
            m_adj = jnp.maximum(m, x_tm)
            s_adj = s * jnp.exp(m - m_adj) + jnp.exp(x_t - m_adj) * factor
        per_sample = m_adj + jnp.log(s_adj) - x_tm              # (tile_n, 1)
        # Mask rows past the true batch size (batch padded to tile_n multiple).
        row = jax.lax.broadcasted_iota(jnp.int32, per_sample.shape, 0)
        per_sample = jnp.where(i * tile_n + row < n_rows, per_sample, 0.0)
        wt = wt_ref[...].astype(jnp.float32)                    # (tile_n, 1)
        part = jnp.sum(wt * per_sample, axis=0, keepdims=True)  # (1, 1)
        out_ref[0] = part

    if n_c_tiles == 1:
        # Fast path: whole class dim resident -> no streaming state needed.
        s_blk = jnp.sum(jnp.exp(x - m_blk), axis=-1, keepdims=True)
        finalize(m_blk, s_blk, xt_blk)
    else:
        @pl.when(j == 0)
        def _():
            m_run[...] = jnp.full_like(m_run, -jnp.inf)
            s_run[...] = jnp.zeros_like(s_run)
            xt_run[...] = jnp.zeros_like(xt_run)

        m_prev = m_run[...]
        m_new = jnp.maximum(m_prev, m_blk)
        s_run[...] = (s_run[...] * jnp.exp(m_prev - m_new)
                      + jnp.sum(jnp.exp(x - m_new), axis=-1, keepdims=True))
        xt_run[...] = xt_run[...] + xt_blk
        m_run[...] = m_new

        @pl.when(j == n_c_tiles - 1)
        def _():
            finalize(m_run[...], s_run[...], xt_run[...])


def dro_loss(x, target, weight=None, epsilon=1.0, tile_n=None, tile_c=None):
    """Pallas implementation of DROLoss.forward.  x: (N, C) logits, target: (N,)."""
    x = jnp.asarray(x)
    n, c = x.shape
    itemsize = jnp.dtype(x.dtype).itemsize
    sub = _SUBLANE.get(itemsize, 8)

    if tile_n is None or tile_c is None:
        auto_n, auto_c = _pick_tiles(n, c, itemsize)
        tile_n = auto_n if tile_n is None else tile_n
        tile_c = auto_c if tile_c is None else tile_c
    tile_n = max(sub, (min(int(tile_n), _round_up(n, sub)) // sub) * sub)
    if tile_c >= c:
        tile_c = c
    else:
        tile_c = max(_LANE, (int(tile_c) // _LANE) * _LANE)
    num_n_tiles = pl.cdiv(n, tile_n)
    num_c_tiles = pl.cdiv(c, tile_c)
    n_pad = num_n_tiles * tile_n
    c_pad = num_c_tiles * tile_c

    tgt_1d = jnp.asarray(target).astype(jnp.int32)
    tgt = tgt_1d.reshape(n, 1)
    if weight is None:
        wt = jnp.ones((n, 1), jnp.float32)
        denom = jnp.float32(n)
    else:
        w = jnp.asarray(weight).astype(jnp.float32).reshape(-1)
        wt = w[tgt_1d].reshape(n, 1)                 # XLA gather over N elements
        denom = jnp.sum(wt)

    if n_pad != n or c_pad != c:
        x = jnp.pad(x, ((0, n_pad - n), (0, c_pad - c)), constant_values=_NEG_PAD)
    if n_pad != n:
        tgt = jnp.pad(tgt, ((0, n_pad - n), (0, 0)))
        wt = jnp.pad(wt, ((0, n_pad - n), (0, 0)))

    # Explicit, generation-safe scoped-VMEM limit (lane-padded accounting):
    # larger tiles must compile on v5e (16 MiB default) yet stay well under
    # v7x's 64 MiB physical VMEM.
    x_buf = tile_n * max(tile_c, _LANE) * itemsize
    aux_buf = tile_n * _LANE * 4
    needed = 2 * x_buf + (2 * 2 + 3) * aux_buf + (1 << 20)
    vmem_limit = int(min(max(needed + (8 << 20), 32 << 20), 48 << 20))

    cost = pl.CostEstimate(
        flops=6 * n_pad * c_pad,
        transcendentals=n_pad * c_pad + 4 * n_pad,
        bytes_accessed=n_pad * c_pad * itemsize + n_pad * 8 + num_n_tiles * 4,
    )

    kernel = functools.partial(
        _dro_kernel, epsilon=float(epsilon), n_rows=n,
        tile_n=tile_n, tile_c=tile_c, n_c_tiles=num_c_tiles)

    partials = pl.pallas_call(
        kernel,
        out_shape=jax.ShapeDtypeStruct((num_n_tiles, 1, 1), jnp.float32),
        grid=(num_n_tiles, num_c_tiles),
        in_specs=[
            pl.BlockSpec((tile_n, tile_c), lambda i, j: (i, j)),
            pl.BlockSpec((tile_n, 1), lambda i, j: (i, 0)),
            pl.BlockSpec((tile_n, 1), lambda i, j: (i, 0)),
        ],
        out_specs=pl.BlockSpec((1, 1, 1), lambda i, j: (i, 0, 0)),
        scratch_shapes=[pltpu.VMEM((tile_n, 1), jnp.float32) for _ in range(3)],
        compiler_params=pltpu.CompilerParams(
            dimension_semantics=("parallel", "arbitrary"),
            vmem_limit_bytes=vmem_limit),
        cost_estimate=cost,
    )(x, tgt, wt)

    return jnp.sum(partials) / denom


def _dro_loss_ref(x, target, weight=None, epsilon=1.0):
    """Pure-JAX reference for validation."""
    n, c = x.shape
    x = x.astype(jnp.float32)
    onehot = jax.nn.one_hot(target, c, dtype=bool)
    out = jnp.where(onehot, x - 2.0 * epsilon, x)
    lse = jax.scipy.special.logsumexp(out, axis=-1)
    out_t = jnp.take_along_axis(out, target[:, None], axis=1)[:, 0]
    per_sample = lse - out_t
    if weight is None:
        return jnp.mean(per_sample)
    w_t = jnp.asarray(weight).astype(jnp.float32)[target]
    return jnp.sum(w_t * per_sample) / jnp.sum(w_t)


if __name__ == "__main__":
    key = jax.random.PRNGKey(0)
    kx, kt, kw = jax.random.split(key, 3)

    N, C = 64, 128
    x = jax.random.normal(kx, (N, C), dtype=jnp.float32)
    target = jax.random.randint(kt, (N,), 0, C, dtype=jnp.int32)
    weight = jax.random.uniform(kw, (C,), minval=0.5, maxval=1.5, dtype=jnp.float32)

    # 1) unweighted, single batch/class tile
    loss = jax.block_until_ready(dro_loss(x, target, epsilon=1.0))
    ref = _dro_loss_ref(x, target, epsilon=1.0)
    assert jnp.allclose(loss, ref, atol=1e-4, rtol=1e-5), (loss, ref)

    # 2) class-weighted (w_t gathered in the wrapper, streamed per-row)
    loss_w = jax.block_until_ready(dro_loss(x, target, weight=weight, epsilon=1.0))
    ref_w = _dro_loss_ref(x, target, weight=weight, epsilon=1.0)
    assert jnp.allclose(loss_w, ref_w, atol=1e-4, rtol=1e-5), (loss_w, ref_w)

    # 3) multiple batch tiles + padded rows
    N2 = 100
    x2 = jax.random.normal(kx, (N2, C), dtype=jnp.float32)
    t2 = jax.random.randint(kt, (N2,), 0, C, dtype=jnp.int32)
    loss2 = jax.block_until_ready(dro_loss(x2, t2, epsilon=0.5, tile_n=32))
    ref2 = _dro_loss_ref(x2, t2, epsilon=0.5)
    assert jnp.allclose(loss2, ref2, atol=1e-4, rtol=1e-5), (loss2, ref2)

    # 4) streaming-LSE path: multiple class tiles + padded columns, weighted
    N3, C3 = 48, 320
    x3 = jax.random.normal(kx, (N3, C3), dtype=jnp.float32)
    t3 = jax.random.randint(kt, (N3,), 0, C3, dtype=jnp.int32)
    w3 = jax.random.uniform(kw, (C3,), minval=0.5, maxval=1.5, dtype=jnp.float32)
    loss3 = jax.block_until_ready(dro_loss(x3, t3, weight=w3, epsilon=1.0, tile_c=128))
    ref3 = _dro_loss_ref(x3, t3, weight=w3, epsilon=1.0)
    assert jnp.allclose(loss3, ref3, atol=1e-4, rtol=1e-5), (loss3, ref3)

    # 5) bf16 logits streamed natively (kernel upcasts per-tile)
    xb = x.astype(jnp.bfloat16)
    loss_b = jax.block_until_ready(dro_loss(xb, target, epsilon=1.0))
    ref_b = _dro_loss_ref(xb.astype(jnp.float32), target, epsilon=1.0)
    assert jnp.allclose(loss_b, ref_b, atol=1e-3, rtol=1e-4), (loss_b, ref_b)

    print("KERNEL_OK")
</pallas_src>

<mosaic_0001>
module attributes {stable_mosaic.version = 11 : i64} {
  func.func @_dro_kernel(%arg0: i32, %arg1: i32, %arg2: memref<64x128xf32, #tpu.memory_space<vmem>>, %arg3: memref<64x1xi32, #tpu.memory_space<vmem>>, %arg4: memref<64x1xf32, #tpu.memory_space<vmem>>, %arg5: memref<1x1x1xf32, #tpu.memory_space<vmem>>, %arg6: memref<64x1xf32, #tpu.memory_space<vmem>>, %arg7: memref<64x1xf32, #tpu.memory_space<vmem>>, %arg8: memref<64x1xf32, #tpu.memory_space<vmem>>) attributes {dimension_semantics = [#tpu.dimension_semantics<parallel>, #tpu.dimension_semantics<arbitrary>], iteration_bounds = array<i64: 1, 1>, scalar_prefetch = 0 : i64, scratch_operands = 3 : i64, tpu.core_type = #tpu.core_type<tc>, window_params = [{transform_indices = @transform_0, window_bounds = array<i64: 64, 128>}, {transform_indices = @transform_1, window_bounds = array<i64: 64, 1>}, {transform_indices = @transform_2, window_bounds = array<i64: 64, 1>}, {transform_indices = @transform_3, window_bounds = array<i64: 1, 1, 1>}]} {
    %c0 = arith.constant 0 : index
    %c0_0 = arith.constant 0 : index
    %0 = vector.load %arg2[%c0, %c0_0] : memref<64x128xf32, #tpu.memory_space<vmem>>, vector<64x128xf32>
    %c0_1 = arith.constant 0 : index
    %c0_2 = arith.constant 0 : index
    %1 = vector.load %arg3[%c0_1, %c0_2] : memref<64x1xi32, #tpu.memory_space<vmem>>, vector<64x1xi32>
    %2 = tpu.iota {dimensions = array<i32: 1>} : vector<64x128xi32>
    %c128_i32 = arith.constant 128 : i32
    %3 = arith.muli %arg1, %c128_i32 : i32
    %4 = vector.broadcast %3 : i32 to vector<64x128xi32>
    %5 = arith.addi %2, %4 : vector<64x128xi32>
    %6 = vector.broadcast %1 : vector<64x1xi32> to vector<64x128xi32>
    %7 = arith.cmpi eq, %5, %6 : vector<64x128xi32>
    %cst = arith.constant 0.000000e+00 : f32
    %8 = vector.broadcast %cst : f32 to vector<64x128xf32>
    %9 = arith.select %7, %0, %8 : vector<64x128xi1>, vector<64x128xf32>
    %cst_3 = arith.constant dense<0.000000e+00> : vector<64xf32>
    %10 = vector.multi_reduction <add>, %9, %cst_3 [1] : vector<64x128xf32> to vector<64xf32>
    %11 = vector.shape_cast %10 : vector<64xf32> to vector<64x1xf32>
    %cst_4 = arith.constant dense<0xFF800000> : vector<64xf32>
    %12 = vector.multi_reduction <maximumf>, %0, %cst_4 [1] : vector<64x128xf32> to vector<64xf32>
    %13 = vector.shape_cast %12 : vector<64xf32> to vector<64x1xf32>
    %14 = vector.broadcast %13 : vector<64x1xf32> to vector<64x128xf32>
    %15 = arith.subf %0, %14 : vector<64x128xf32>
    %16 = math.exp %15 : vector<64x128xf32>
    %cst_5 = arith.constant dense<0.000000e+00> : vector<64xf32>
    %17 = vector.multi_reduction <add>, %16, %cst_5 [1] : vector<64x128xf32> to vector<64xf32>
    %18 = vector.shape_cast %17 : vector<64xf32> to vector<64x1xf32>
    %cst_6 = arith.constant 2.000000e+00 : f32
    %19 = vector.broadcast %cst_6 : f32 to vector<64x1xf32>
    %20 = arith.subf %11, %19 : vector<64x1xf32>
    %21 = arith.subf %11, %13 : vector<64x1xf32>
    %22 = math.exp %21 : vector<64x1xf32>
    %cst_7 = arith.constant -0.864664733 : f32
    %23 = vector.broadcast %cst_7 : f32 to vector<64x1xf32>
    %24 = arith.mulf %22, %23 : vector<64x1xf32>
    %25 = arith.addf %18, %24 : vector<64x1xf32>
    %26 = math.log %25 : vector<64x1xf32>
    %27 = arith.addf %13, %26 : vector<64x1xf32>
    %28 = arith.subf %27, %20 : vector<64x1xf32>
    %29 = tpu.iota {dimensions = array<i32: 0>} : vector<64x1xi32>
    %c64_i32 = arith.constant 64 : i32
    %30 = arith.muli %arg0, %c64_i32 : i32
    %31 = vector.broadcast %30 : i32 to vector<64x1xi32>
    %32 = arith.addi %31, %29 : vector<64x1xi32>
    %c64_i32_8 = arith.constant 64 : i32
    %33 = vector.broadcast %c64_i32_8 : i32 to vector<64x1xi32>
    %34 = arith.cmpi slt, %32, %33 : vector<64x1xi32>
    %cst_9 = arith.constant 0.000000e+00 : f32
    %35 = vector.broadcast %cst_9 : f32 to vector<64x1xf32>
    %36 = arith.select %34, %28, %35 : vector<64x1xi1>, vector<64x1xf32>
    %c0_10 = arith.constant 0 : index
    %c0_11 = arith.constant 0 : index
    %37 = vector.load %arg4[%c0_10, %c0_11] : memref<64x1xf32, #tpu.memory_space<vmem>>, vector<64x1xf32>
    %38 = arith.mulf %37, %36 : vector<64x1xf32>
    %cst_12 = arith.constant dense<0.000000e+00> : vector<1xf32>
    %39 = vector.multi_reduction <add>, %38, %cst_12 [0] : vector<64x1xf32> to vector<1xf32>
    %40 = vector.shape_cast %39 : vector<1xf32> to vector<1x1xf32>
    %c0_13 = arith.constant 0 : index
    %c0_14 = arith.constant 0 : index
    %c0_15 = arith.constant 0 : index
    %41 = vector.load %arg5[%c0_13, %c0_14, %c0_15] : memref<1x1x1xf32, #tpu.memory_space<vmem>>, vector<1x1x1xf32>
    %42 = vector.shape_cast %41 : vector<1x1x1xf32> to vector<1x1xf32>
    %43 = vector.shape_cast %40 : vector<1x1xf32> to vector<1x1x1xf32>
    tpu.vector_store %arg5[%c0_13, %c0_14, %c0_15], %43 {strides = array<i32>} : memref<1x1x1xf32, #tpu.memory_space<vmem>>, vector<1x1x1xf32>,
    return
  }
  func.func @transform_0(%arg0: i32, %arg1: i32) -> (i32, i32) {
    %c0_i32 = arith.constant 0 : i32
    return %arg0, %arg1 : i32, i32
  }
  func.func @transform_1(%arg0: i32, %arg1: i32) -> (i32, i32) {
    %c0_i32 = arith.constant 0 : i32
    %c0_i32_0 = arith.constant 0 : i32
    return %arg0, %c0_i32 : i32, i32
  }
  func.func @transform_2(%arg0: i32, %arg1: i32) -> (i32, i32) {
    %c0_i32 = arith.constant 0 : i32
    %c0_i32_0 = arith.constant 0 : i32
    return %arg0, %c0_i32 : i32, i32
  }
  func.func @transform_3(%arg0: i32, %arg1: i32) -> (i32, i32, i32) {
    %c0_i32 = arith.constant 0 : i32
    %c0_i32_0 = arith.constant 0 : i32
    %c0_i32_1 = arith.constant 0 : i32
    return %arg0, %c0_i32, %c0_i32_0 : i32, i32, i32
  }
}

</mosaic_0001>

<llo_original>
// kernel: tpu_custom_call.1
$region0: #{tpu_custom_call.1}
  #allocation0 [shape = 'u32[]', space=smem, size = 0x4, offset = 0x4, fixed_abs, tag = 'smem constant byte address 0x4 - core index']
  #allocation1 [shape = 'u32[144,128]{1,0:T(1,128)}', space=vmem, size = 0x12000, scoped, tag = 'internal scratch']
  #allocation2 [shape = 'f32[64,1]{1,0:T(8,128)}', space=vmem, size = 0x8000, scoped, tag = 'scratch operand']
  #allocation3 [shape = 'f32[64,1]{1,0:T(8,128)}', space=vmem, size = 0x8000, scoped, tag = 'scratch operand']
  #allocation4 [shape = 'f32[64,1]{1,0:T(8,128)}', space=vmem, size = 0x8000, scoped, tag = 'scratch operand']
  %s0 = inlined_call_operand.vmem [shape: f32[64,128], index: 0, kind: input, shape index: {}]
  %s1 = inlined_call_operand.vmem [shape: s32[64,1], index: 1, kind: input, shape index: {}]
  %s2 = inlined_call_operand.vmem [shape: f32[64,1], index: 2, kind: input, shape index: {}]
  %s3 = inlined_call_operand.hbm [shape: f32[1,1,1], index: 3, kind: output, shape index: {}]
  %s4 = sld [smem:[#allocation0]]
  $region22: #{tpu_custom_call.1} parent=0
    _
  %s6 = ssub.s32 1, %s4
  %s7 = scalar_select 0, %s6, %s4
  $region1: #{tpu_custom_call.1} parent=0
    #allocation5 [shape = 'u8[512]{0}', space=vmem, size = 0x400, scoped, tag = 'output window, operand 0, single buffered']
    #allocation6 [shape = 's32[1]{0}', space=sflag, size = 0x4, scoped, tag = 'scoped memory for tpu_custom_call.1']
    %8 = vsyncpa [#allocation6], 0
    // Predicated region
    $region2: #{tpu_custom_call.1} parent=1 // pred_check
      _
    $region3: #{tpu_custom_call.1} parent=1 // pred_check_branch
      %10 = sbr.rel (0) target = $region5
    $region4: #{tpu_custom_call.1} parent=1 // pred_region
      _
    $region5: #{tpu_custom_call.1} parent=1 // pred_fallthru
      _
    // Predicated region
    $region6: #{tpu_custom_call.1} parent=1 // pred_check
      _
    $region7: #{tpu_custom_call.1} parent=1 // pred_check_branch
      %12 = sbr.rel (0) target = $region9
    $region8: #{tpu_custom_call.1} parent=1 // pred_region
      _
    $region9: #{tpu_custom_call.1} parent=1 // pred_fallthru
      _
    // Predicated region
    $region10: #{tpu_custom_call.1} parent=1 // pred_check
      _
    $region11: #{tpu_custom_call.1} parent=1 // pred_check_branch
      %14 = sbr.rel (0) target = $region13
    $region12: #{tpu_custom_call.1} parent=1 // pred_region
      _
    $region13: #{tpu_custom_call.1} parent=1 // pred_fallthru
      _
    %v15 = vld [vmem:[%s0] sm:$0xff]
    %v16 = vld [vmem:[%s0 + $0x8] sm:$0xff]
    %v17 = vld [vmem:[%s0 + $0x10] sm:$0xff]
    %v18 = vld [vmem:[%s0 + $0x18] sm:$0xff]
    %v19 = vld [vmem:[%s0 + $0x20] sm:$0xff]
    %v20 = vld [vmem:[%s0 + $0x28] sm:$0xff]
    %v21 = vld [vmem:[%s0 + $0x30] sm:$0xff]
    %v22 = vld [vmem:[%s0 + $0x38] sm:$0xff]
    %v23 = vld [vmem:[%s1] sm:$0xff]
    %v24 = vld [vmem:[%s1 + $0x8] sm:$0xff]
    %v25 = vld [vmem:[%s1 + $0x10] sm:$0xff]
    %v26 = vld [vmem:[%s1 + $0x18] sm:$0xff]
    %v27 = vld [vmem:[%s1 + $0x20] sm:$0xff]
    %v28 = vld [vmem:[%s1 + $0x28] sm:$0xff]
    %v29 = vld [vmem:[%s1 + $0x30] sm:$0xff]
    %v30 = vld [vmem:[%s1 + $0x38] sm:$0xff]
    %v31 = vlaneseq
    %v32 = vand.u32 %v31, 127
    %s33 = smul.u32 0, 128
    %v34 = vstv %s33
    %v35 = vadd.s32 %v32, %v34
    %36 = vset.pattern.permute.xlu0 0
    %37 = vperm.xlu0 %36, %v23
    %v38 = vpop.permute.xlu0 %37
    %39 = vset.pattern.permute.xlu0 0
    %40 = vperm.xlu0 %39, %v24
    %v41 = vpop.permute.xlu0 %40
    %42 = vset.pattern.permute.xlu0 0
    %43 = vperm.xlu0 %42, %v25
    %v44 = vpop.permute.xlu0 %43
    %45 = vset.pattern.permute.xlu0 0
    %46 = vperm.xlu0 %45, %v26
    %v47 = vpop.permute.xlu0 %46
    %48 = vset.pattern.permute.xlu0 0
    %49 = vperm.xlu0 %48, %v27
    %v50 = vpop.permute.xlu0 %49
    %51 = vset.pattern.permute.xlu0 0
    %52 = vperm.xlu0 %51, %v28
    %v53 = vpop.permute.xlu0 %52
    %54 = vset.pattern.permute.xlu0 0
    %55 = vperm.xlu0 %54, %v29
    %v56 = vpop.permute.xlu0 %55
    %57 = vset.pattern.permute.xlu0 0
    %58 = vperm.xlu0 %57, %v30
    %v59 = vpop.permute.xlu0 %58
    %vm60 = vcmp.eq.s32.totalorder %v35, %v38
    %vm61 = vcmp.eq.s32.totalorder %v35, %v41
    %vm62 = vcmp.eq.s32.totalorder %v35, %v44
    %vm63 = vcmp.eq.s32.totalorder %v35, %v47
    %vm64 = vcmp.eq.s32.totalorder %v35, %v50
    %vm65 = vcmp.eq.s32.totalorder %v35, %v53
    %vm66 = vcmp.eq.s32.totalorder %v35, %v56
    %vm67 = vcmp.eq.s32.totalorder %v35, %v59
    %v68 = vsel %vm60, %v15, 0.0
    %v69 = vsel %vm61, %v16, 0.0
    %v70 = vsel %vm62, %v17, 0.0
    %v71 = vsel %vm63, %v18, 0.0
    %v72 = vsel %vm64, %v19, 0.0
    %v73 = vsel %vm65, %v20, 0.0
    %v74 = vsel %vm66, %v21, 0.0
    %v75 = vsel %vm67, %v22, 0.0
    %76 = vadd.xlane.f32.xlu0 %v68
    %v77 = vpop.xlane.xlu0 %76
    %78 = vadd.xlane.f32.xlu0 %v69
    %v79 = vpop.xlane.xlu0 %78
    %80 = vadd.xlane.f32.xlu0 %v70
    %v81 = vpop.xlane.xlu0 %80
    %82 = vadd.xlane.f32.xlu0 %v71
    %v83 = vpop.xlane.xlu0 %82
    %84 = vadd.xlane.f32.xlu0 %v72
    %v85 = vpop.xlane.xlu0 %84
    %86 = vadd.xlane.f32.xlu0 %v73
    %v87 = vpop.xlane.xlu0 %86
    %88 = vadd.xlane.f32.xlu0 %v74
    %v89 = vpop.xlane.xlu0 %88
    %90 = vadd.xlane.f32.xlu0 %v75
    %v91 = vpop.xlane.xlu0 %90
    %92 = vmax.xlane.f32.xlu0 %v15
    %v93 = vpop.xlane.xlu0 %92
    %94 = vmax.xlane.f32.xlu0 %v16
    %v95 = vpop.xlane.xlu0 %94
    %96 = vmax.xlane.f32.xlu0 %v17
    %v97 = vpop.xlane.xlu0 %96
    %98 = vmax.xlane.f32.xlu0 %v18
    %v99 = vpop.xlane.xlu0 %98
    %100 = vmax.xlane.f32.xlu0 %v19
    %v101 = vpop.xlane.xlu0 %100
    %102 = vmax.xlane.f32.xlu0 %v20
    %v103 = vpop.xlane.xlu0 %102
    %104 = vmax.xlane.f32.xlu0 %v21
    %v105 = vpop.xlane.xlu0 %104
    %106 = vmax.xlane.f32.xlu0 %v22
    %v107 = vpop.xlane.xlu0 %106
    %v108 = vsub.f32 %v15, %v93
    %v109 = vsub.f32 %v16, %v95
    %v110 = vsub.f32 %v17, %v97
    %v111 = vsub.f32 %v18, %v99
    %v112 = vsub.f32 %v19, %v101
    %v113 = vsub.f32 %v20, %v103
    %v114 = vsub.f32 %v21, %v105
    %v115 = vsub.f32 %v22, %v107
    %v116 = vmul.f32 %v108, 1.442695
    %v117 = vpow.pop %v116
    %v118 = vmul.f32 %v109, 1.442695
    %v119 = vpow.pop %v118
    %v120 = vmul.f32 %v110, 1.442695
    %v121 = vpow.pop %v120
    %v122 = vmul.f32 %v111, 1.442695
    %v123 = vpow.pop %v122
    %v124 = vmul.f32 %v112, 1.442695
    %v125 = vpow.pop %v124
    %v126 = vmul.f32 %v113, 1.442695
    %v127 = vpow.pop %v126
    %v128 = vmul.f32 %v114, 1.442695
    %v129 = vpow.pop %v128
    %v130 = vmul.f32 %v115, 1.442695
    %v131 = vpow.pop %v130
    %132 = vadd.xlane.f32.xlu0 %v117
    %v133 = vpop.xlane.xlu0 %132
    %134 = vadd.xlane.f32.xlu0 %v119
    %v135 = vpop.xlane.xlu0 %134
    %136 = vadd.xlane.f32.xlu0 %v121
    %v137 = vpop.xlane.xlu0 %136
    %138 = vadd.xlane.f32.xlu0 %v123
    %v139 = vpop.xlane.xlu0 %138
    %140 = vadd.xlane.f32.xlu0 %v125
    %v141 = vpop.xlane.xlu0 %140
    %142 = vadd.xlane.f32.xlu0 %v127
    %v143 = vpop.xlane.xlu0 %142
    %144 = vadd.xlane.f32.xlu0 %v129
    %v145 = vpop.xlane.xlu0 %144
    %146 = vadd.xlane.f32.xlu0 %v131
    %v147 = vpop.xlane.xlu0 %146
    %v148 = vsub.f32 %v77, 2.0
    %v149 = vsub.f32 %v79, 2.0
    %v150 = vsub.f32 %v81, 2.0
    %v151 = vsub.f32 %v83, 2.0
    %v152 = vsub.f32 %v85, 2.0
    %v153 = vsub.f32 %v87, 2.0
    %v154 = vsub.f32 %v89, 2.0
    %v155 = vsub.f32 %v91, 2.0
    %v156 = vsub.f32 %v77, %v93
    %v157 = vsub.f32 %v79, %v95
    %v158 = vsub.f32 %v81, %v97
    %v159 = vsub.f32 %v83, %v99
    %v160 = vsub.f32 %v85, %v101
    %v161 = vsub.f32 %v87, %v103
    %v162 = vsub.f32 %v89, %v105
    %v163 = vsub.f32 %v91, %v107
    %v164 = vmul.f32 %v156, 1.442695
    %v165 = vpow.pop %v164
    %v166 = vmul.f32 %v157, 1.442695
    %v167 = vpow.pop %v166
    %v168 = vmul.f32 %v158, 1.442695
    %v169 = vpow.pop %v168
    %v170 = vmul.f32 %v159, 1.442695
    %v171 = vpow.pop %v170
    %v172 = vmul.f32 %v160, 1.442695
    %v173 = vpow.pop %v172
    %v174 = vmul.f32 %v161, 1.442695
    %v175 = vpow.pop %v174
    %v176 = vmul.f32 %v162, 1.442695
    %v177 = vpow.pop %v176
    %v178 = vmul.f32 %v163, 1.442695
    %v179 = vpow.pop %v178
    %v180 = vmul.f32 %v165, -0.86466473
    %v181 = vmul.f32 %v167, -0.86466473
    %v182 = vmul.f32 %v169, -0.86466473
    %v183 = vmul.f32 %v171, -0.86466473
    %v184 = vmul.f32 %v173, -0.86466473
    %v185 = vmul.f32 %v175, -0.86466473
    %v186 = vmul.f32 %v177, -0.86466473
    %v187 = vmul.f32 %v179, -0.86466473
    %v188 = vadd.f32 %v133, %v180
    %v189 = vadd.f32 %v135, %v181
    %v190 = vadd.f32 %v137, %v182
    %v191 = vadd.f32 %v139, %v183
    %v192 = vadd.f32 %v141, %v184
    %v193 = vadd.f32 %v143, %v185
    %v194 = vadd.f32 %v145, %v186
    %v195 = vadd.f32 %v147, %v187
    %v196 = vlog2.pop %v188
    %v197 = vmul.f32 %v196, 0.6931472
    %v198 = vlog2.pop %v189
    %v199 = vmul.f32 %v198, 0.6931472
    %v200 = vlog2.pop %v190
    %v201 = vmul.f32 %v200, 0.6931472
    %v202 = vlog2.pop %v191
    %v203 = vmul.f32 %v202, 0.6931472
    %v204 = vlog2.pop %v192
    %v205 = vmul.f32 %v204, 0.6931472
    %v206 = vlog2.pop %v193
    %v207 = vmul.f32 %v206, 0.6931472
    %v208 = vlog2.pop %v194
    %v209 = vmul.f32 %v208, 0.6931472
    %v210 = vlog2.pop %v195
    %v211 = vmul.f32 %v210, 0.6931472
    %v212 = vadd.f32 %v93, %v197
    %v213 = vadd.f32 %v95, %v199
    %v214 = vadd.f32 %v97, %v201
    %v215 = vadd.f32 %v99, %v203
    %v216 = vadd.f32 %v101, %v205
    %v217 = vadd.f32 %v103, %v207
    %v218 = vadd.f32 %v105, %v209
    %v219 = vadd.f32 %v107, %v211
    %v220 = vsub.f32 %v212, %v148
    %v221 = vsub.f32 %v213, %v149
    %v222 = vsub.f32 %v214, %v150
    %v223 = vsub.f32 %v215, %v151
    %v224 = vsub.f32 %v216, %v152
    %v225 = vsub.f32 %v217, %v153
    %v226 = vsub.f32 %v218, %v154
    %v227 = vsub.f32 %v219, %v155
    %v228 = vlaneseq
    %v229 = vshrl.u32 %v228, 7
    %v230 = vadd.s32 %v229, 8
    %v231 = vadd.s32 %v229, 16
    %v232 = vadd.s32 %v229, 24
    %v233 = vadd.s32 %v229, 32
    %v234 = vadd.s32 %v229, 40
    %v235 = vadd.s32 %v229, 48
    %v236 = vadd.s32 %v229, 56
    %s237 = smul.u32 0, 64
    %v238 = vstv %s237
    %v239 = vadd.s32 %v238, %v229
    %v240 = vadd.s32 %v238, %v230
    %v241 = vadd.s32 %v238, %v231
    %v242 = vadd.s32 %v238, %v232
    %v243 = vadd.s32 %v238, %v233
    %v244 = vadd.s32 %v238, %v234
    %v245 = vadd.s32 %v238, %v235
    %v246 = vadd.s32 %v238, %v236
    %vm247 = vcmp.lt.s32.totalorder %v239, 64
    %vm248 = vcmp.lt.s32.totalorder %v240, 64
    %vm249 = vcmp.lt.s32.totalorder %v241, 64
    %vm250 = vcmp.lt.s32.totalorder %v242, 64
    %vm251 = vcmp.lt.s32.totalorder %v243, 64
    %vm252 = vcmp.lt.s32.totalorder %v244, 64
    %vm253 = vcmp.lt.s32.totalorder %v245, 64
    %vm254 = vcmp.lt.s32.totalorder %v246, 64
    %v255 = vsel %vm247, %v220, 0.0
    %v256 = vsel %vm248, %v221, 0.0
    %v257 = vsel %vm249, %v222, 0.0
    %v258 = vsel %vm250, %v223, 0.0
    %v259 = vsel %vm251, %v224, 0.0
    %v260 = vsel %vm252, %v225, 0.0
    %v261 = vsel %vm253, %v226, 0.0
    %v262 = vsel %vm254, %v227, 0.0
    %v263 = vld [vmem:[%s2] sm:$0xff]
    %v264 = vld [vmem:[%s2 + $0x8] sm:$0xff]
    %v265 = vld [vmem:[%s2 + $0x10] sm:$0xff]
    %v266 = vld [vmem:[%s2 + $0x18] sm:$0xff]
    %v267 = vld [vmem:[%s2 + $0x20] sm:$0xff]
    %v268 = vld [vmem:[%s2 + $0x28] sm:$0xff]
    %v269 = vld [vmem:[%s2 + $0x30] sm:$0xff]
    %v270 = vld [vmem:[%s2 + $0x38] sm:$0xff]
    %v271 = vmul.f32 %v263, %v255
    %v272 = vmul.f32 %v264, %v256
    %v273 = vmul.f32 %v265, %v257
    %v274 = vmul.f32 %v266, %v258
    %v275 = vmul.f32 %v267, %v259
    %v276 = vmul.f32 %v268, %v260
    %v277 = vmul.f32 %v269, %v261
    %v278 = vmul.f32 %v270, %v262
    %vm279 = vcmask 7168
    %v280 = vsel %vm279, %v271, 0.0
    %v281 = vsel %vm279, %v272, 0.0
    %v282 = vadd.f32 %v280, %v281
    %v283 = vsel %vm279, %v273, 0.0
    %v284 = vadd.f32 %v282, %v283
    %v285 = vsel %vm279, %v274, 0.0
    %v286 = vadd.f32 %v284, %v285
    %v287 = vsel %vm279, %v275, 0.0
    %v288 = vadd.f32 %v286, %v287
    %v289 = vsel %vm279, %v276, 0.0
    %v290 = vadd.f32 %v288, %v289
    %v291 = vsel %vm279, %v277, 0.0
    %v292 = vadd.f32 %v290, %v291
    %v293 = vsel %vm279, %v278, 0.0
    %v294 = vadd.f32 %v292, %v293
    %v295 = vrot.slane %v294, 4
    %v296 = vadd.f32 %v294, %v295
    %v297 = vrot.slane %v296, 2
    %v298 = vadd.f32 %v296, %v297
    %v299 = vrot.slane %v298, 1
    %v300 = vadd.f32 %v298, %v299
    %vm301 = vcmask 0
    %302 = vst.msk [vmem:[#allocation5] sm:$0x1] %vm301, %v300
    // Predicated region
    $region14: #{tpu_custom_call.1} parent=1 // pred_check
      _
    $region15: #{tpu_custom_call.1} parent=1 // pred_check_branch
      %304 = sbr.rel (0) target = $region17
    $region16: #{tpu_custom_call.1} parent=1 // pred_region
      %s306 = ssub.s32 16, 16
      %307 = vsyncadd [#allocation6], %s306
      %s309 = sshll.u32 [#allocation5], 4
      %s310 = int_to_ptr.vmem [resolvable:$true] %s309
      %312 = dma.vmem_to_hbm [thread:$0]  %s310, 16, %s3, [#allocation6]
    $region17: #{tpu_custom_call.1} parent=1 // pred_fallthru
      _
    // Predicated region
    $region18: #{tpu_custom_call.1} parent=1 // pred_check
      _
    $region19: #{tpu_custom_call.1} parent=1 // pred_check_branch
      %314 = sbr.rel (0) target = $region21
    $region20: #{tpu_custom_call.1} parent=1 // pred_region
      %315 = dma.done [#allocation6], 16
    $region21: #{tpu_custom_call.1} parent=1 // pred_fallthru
      _
    %316 = vsyncpa [#allocation6], 1

</llo_original>
